<compile_context>
chip_gen: v6e
topology: v6e:2x2x1
jax: 0.10.0
libtpu: 0.0.40
codegen_flags: <defaults>
</compile_context>

<pallas_src>
import functools

import jax
import jax.numpy as jnp
from jax.experimental import pallas as pl
from jax.experimental.pallas import tpu as pltpu


def _round_up(n, m):
    return ((n + m - 1) // m) * m


def _act(v, activation):
    if activation == "relu":
        return jnp.maximum(v, 0.0)
    # exact (erf) GELU for parity with torch.nn.functional.gelu's default.
    return jax.nn.gelu(v, approximate=False)


def _head_kernel(x_ref, y_ref, w1_ref, b1_ref, w2_ref, b2_ref, w3_ref, b3_ref,
                 o_ref, *, interaction, activation, compute_dtype):
    # Element-wise work in f32 (v5e VPU has no bf16 path); cast to
    # compute_dtype only right before each MXU dot.
    xf = x_ref[...].astype(jnp.float32)
    yf = y_ref[...].astype(jnp.float32)
    if interaction == "NLI":
        pieces = (xf, yf, xf * yf, xf - yf)
    else:
        pieces = (xf, yf)
    # Lane-concat of 128-aligned pieces -> ONE K = mult*fp contraction; the
    # MXU accumulates over K (no VPU adds of popped partial results).
    z = jnp.concatenate([p.astype(compute_dtype) for p in pieces], axis=1)
    h1 = _act(jnp.dot(z, w1_ref[...],
                      preferred_element_type=jnp.float32) + b1_ref[...],
              activation)
    h2 = _act(jnp.dot(h1.astype(compute_dtype), w2_ref[...],
                      preferred_element_type=jnp.float32) + b2_ref[...],
              activation)
    out = jnp.dot(h2.astype(compute_dtype), w3_ref[...],
                  preferred_element_type=jnp.float32) + b3_ref[...]
    o_ref[...] = out.astype(o_ref.dtype)


def _const_spec(arr):
    # Constant block index -> operand is VMEM-resident across the whole grid;
    # single-buffer it (a second pipeline buffer would be dead VMEM).
    idx = lambda i: (0, 0)
    try:
        return pl.BlockSpec(arr.shape, idx, pipeline_mode=pl.Buffered(1))
    except TypeError:  # older jax without pipeline_mode on BlockSpec
        return pl.BlockSpec(arr.shape, idx)


def dual_classification_head(x, y, params, *, interaction=None,
                             activation="relu",
                             compute_dtype=jnp.bfloat16,
                             batch_tile=512):
    """x, y: (B, in_features) float32. Returns (B, n_classes) float32."""
    w1, b1, w2, b2, w3, b3 = params
    B, f = x.shape
    mult = 4 if interaction == "NLI" else 2
    assert w1.shape[0] == mult * f
    O1 = w1.shape[1]
    O2 = w2.shape[1]
    C = w3.shape[1]

    # ---- wrapper-side layout plumbing ------------------------------------
    # Pad every contraction / output width to a lane multiple (128).  Zero
    # padding is exact: padded bias columns are 0 and relu(0) = gelu(0) = 0.
    fp = _round_up(f, 128)
    O1p = _round_up(O1, 128)
    O2p = _round_up(O2, 128)
    Cp = _round_up(C, 128)

    f32 = jnp.float32
    w1p = jnp.zeros((mult * fp, O1p), f32)
    for k in range(mult):
        w1p = w1p.at[k * fp:k * fp + f, :O1].set(w1[k * f:(k + 1) * f, :])
    b1p = jnp.zeros((1, O1p), f32).at[:, :O1].set(b1)
    w2p = jnp.zeros((O1p, O2p), f32).at[:O1, :O2].set(w2)
    b2p = jnp.zeros((1, O2p), f32).at[:, :O2].set(b2)
    w3p = jnp.zeros((O2p, Cp), f32).at[:O2, :C].set(w3)
    b3p = jnp.zeros((1, Cp), f32).at[:, :C].set(b3)

    # Matmul operands (weights AND activations) in compute_dtype; biases and
    # accumulation stay f32.
    w1c = w1p.astype(compute_dtype)
    w2c = w2p.astype(compute_dtype)
    w3c = w3p.astype(compute_dtype)
    itemsize = jnp.dtype(compute_dtype).itemsize

    # ---- batch tile from the post-Buffered(1) VMEM footprint --------------
    w_bytes = (mult * fp * O1p + O1p * O2p + O2p * Cp) * itemsize
    b_bytes = (O1p + O2p + Cp) * 4
    per_row = (2 * (2 * fp * itemsize)          # x + y blocks, double-buffered
               + 2 * Cp * 4                     # output block, double-buffered
               + 2 * (mult * fp + O1p + O2p + Cp) * 4)  # intermediates slack
    budget = 40 << 20                           # v7x-safe working budget
    avail = budget - w_bytes - b_bytes - (2 << 20)
    tb_cap = max(8, (avail // max(per_row, 1)) // 8 * 8)

    B8 = _round_up(B, 8)
    TB = _round_up(min(batch_tile, B8), 8)
    TB = min(TB, tb_cap)
    # Guarantee >= 2 grid steps for non-trivial batches so the "parallel"
    # batch axis actually shards across v7x's two TensorCores.
    if B8 >= 16 and TB >= B8:
        TB = _round_up((B8 + 1) // 2, 8)
    Bp = _round_up(B, TB)

    xp = jnp.zeros((Bp, fp), compute_dtype).at[:B, :f].set(
        x.astype(compute_dtype))
    yp = jnp.zeros((Bp, fp), compute_dtype).at[:B, :f].set(
        y.astype(compute_dtype))

    operands = (xp, yp, w1c, b1p, w2c, b2p, w3c, b3p)
    row_spec = lambda width: pl.BlockSpec((TB, width), lambda i: (i, 0))
    in_specs = ([row_spec(fp), row_spec(fp)]
                + [_const_spec(a) for a in operands[2:]])

    # Explicit, v7x-safe VMEM limit: weights counted once (single-buffered),
    # activation/output blocks twice; clamped below v7x's 64 MiB physical.
    vmem_limit = w_bytes + b_bytes + TB * per_row + (4 << 20)
    vmem_limit = int(min(max(vmem_limit, 16 << 20), 48 << 20))

    flops = 2 * Bp * (mult * fp * O1p + O1p * O2p + O2p * Cp)
    transcendentals = 0 if activation == "relu" else Bp * (O1p + O2p)
    bytes_accessed = (sum(int(a.size) * a.dtype.itemsize for a in operands)
                      + Bp * Cp * 4)

    kernel = functools.partial(_head_kernel, interaction=interaction,
                               activation=activation,
                               compute_dtype=compute_dtype)

    out_padded = pl.pallas_call(
        kernel,
        out_shape=jax.ShapeDtypeStruct((Bp, Cp), jnp.float32),
        grid=(Bp // TB,),
        in_specs=in_specs,
        out_specs=pl.BlockSpec((TB, Cp), lambda i: (i, 0)),
        compiler_params=pltpu.CompilerParams(
            dimension_semantics=("parallel",),
            vmem_limit_bytes=vmem_limit),
        cost_estimate=pl.CostEstimate(flops=flops,
                                      transcendentals=transcendentals,
                                      bytes_accessed=bytes_accessed),
    )(*operands)

    return out_padded[:B, :C]


def init_params(key, in_features, out_features, n_classes, interaction=None):
    """Deterministic synthetic parameters matching the PyTorch module shapes.
    Weights stored transposed: (in_dim, out_dim); biases kept 2-D (1, out)."""
    mult = 4 if interaction == "NLI" else 2
    dims = [(mult * in_features, out_features),
            (out_features, out_features // 2),
            (out_features // 2, n_classes)]
    keys = jax.random.split(key, 6)
    params = []
    for i, (din, dout) in enumerate(dims):
        bound = 1.0 / (din ** 0.5)
        w = jax.random.uniform(keys[2 * i], (din, dout), jnp.float32,
                               minval=-bound, maxval=bound)
        b = jax.random.uniform(keys[2 * i + 1], (1, dout), jnp.float32,
                               minval=-bound, maxval=bound)
        params += [w, b]
    return tuple(params)


def reference(x, y, params, *, interaction=None, activation="relu"):
    w1, b1, w2, b2, w3, b3 = params
    act = (jax.nn.relu if activation == "relu"
           else functools.partial(jax.nn.gelu, approximate=False))
    if interaction == "NLI":
        z = jnp.concatenate([x, y, x * y, x - y], axis=1)
    else:
        z = jnp.concatenate([x, y], axis=1)
    z = act(z @ w1 + b1)
    z = act(z @ w2 + b2)
    return z @ w3 + b3


if __name__ == "__main__":
    key = jax.random.PRNGKey(0)

    # Case 1: NLI interaction, small unaligned in_features, f32 operands.
    B, in_features, out_features, n_classes = 2, 32, 64, 8
    kx, ky, kp = jax.random.split(key, 3)
    x = jax.random.normal(kx, (B, in_features), jnp.float32)
    y = jax.random.normal(ky, (B, in_features), jnp.float32)
    params = init_params(kp, in_features, out_features, n_classes,
                         interaction="NLI")
    out = dual_classification_head(x, y, params, interaction="NLI",
                                   activation="relu",
                                   compute_dtype=jnp.float32)
    out = jax.block_until_ready(out)
    ref = reference(x, y, params, interaction="NLI", activation="relu")
    assert out.shape == (B, n_classes)
    assert jnp.allclose(out, ref, atol=1e-4, rtol=1e-4)

    # Case 1b: same config with the default bf16 operands (looser tolerance).
    out_bf16 = dual_classification_head(x, y, params, interaction="NLI",
                                        activation="relu")
    out_bf16 = jax.block_until_ready(out_bf16)
    assert jnp.allclose(out_bf16, ref, atol=0.2, rtol=0.05)

    # Case 2: no interaction, lane-aligned in_features, f32 operands.
    B2, f2, o2, c2 = 4, 128, 64, 8
    k2x, k2y, k2p = jax.random.split(jax.random.PRNGKey(1), 3)
    x2 = jax.random.normal(k2x, (B2, f2), jnp.float32)
    y2 = jax.random.normal(k2y, (B2, f2), jnp.float32)
    params2 = init_params(k2p, f2, o2, c2, interaction=None)
    out2 = dual_classification_head(x2, y2, params2, interaction=None,
                                    activation="relu",
                                    compute_dtype=jnp.float32)
    out2 = jax.block_until_ready(out2)
    ref2 = reference(x2, y2, params2, interaction=None, activation="relu")
    assert out2.shape == (B2, c2)
    assert jnp.allclose(out2, ref2, atol=1e-4, rtol=1e-4)

    # Case 3: larger batch -> exercises the >=2-grid-step cap (TB=16, grid=2,
    # padded rows in the last tile) and per-tile pipelining, f32 operands.
    B3 = 24
    k3x, k3y = jax.random.split(jax.random.PRNGKey(2), 2)
    x3 = jax.random.normal(k3x, (B3, in_features), jnp.float32)
    y3 = jax.random.normal(k3y, (B3, in_features), jnp.float32)
    out3 = dual_classification_head(x3, y3, params, interaction="NLI",
                                    activation="relu",
                                    compute_dtype=jnp.float32)
    out3 = jax.block_until_ready(out3)
    ref3 = reference(x3, y3, params, interaction="NLI", activation="relu")
    assert out3.shape == (B3, n_classes)
    assert jnp.allclose(out3, ref3, atol=1e-4, rtol=1e-4)

    print("KERNEL_OK")
</pallas_src>

<mosaic_0001>
module attributes {stable_mosaic.version = 11 : i64} {
  func.func @_head_kernel(%arg0: i32, %arg1: memref<8x128xf32, #tpu.memory_space<vmem>>, %arg2: memref<8x128xf32, #tpu.memory_space<vmem>>, %arg3: memref<512x128xf32, #tpu.memory_space<vmem>>, %arg4: memref<1x128xf32, #tpu.memory_space<vmem>>, %arg5: memref<128x128xf32, #tpu.memory_space<vmem>>, %arg6: memref<1x128xf32, #tpu.memory_space<vmem>>, %arg7: memref<128x128xf32, #tpu.memory_space<vmem>>, %arg8: memref<1x128xf32, #tpu.memory_space<vmem>>, %arg9: memref<8x128xf32, #tpu.memory_space<vmem>>) attributes {dimension_semantics = [#tpu.dimension_semantics<parallel>], iteration_bounds = array<i64: 1>, scalar_prefetch = 0 : i64, scratch_operands = 0 : i64, tpu.core_type = #tpu.core_type<tc>, window_params = [{transform_indices = @transform_0, window_bounds = array<i64: 8, 128>}, {transform_indices = @transform_1, window_bounds = array<i64: 8, 128>}, {pipeline_mode = #tpu.pipeline_mode<synchronous>, transform_indices = @transform_2, window_bounds = array<i64: 512, 128>}, {pipeline_mode = #tpu.pipeline_mode<synchronous>, transform_indices = @transform_3, window_bounds = array<i64: 1, 128>}, {pipeline_mode = #tpu.pipeline_mode<synchronous>, transform_indices = @transform_4, window_bounds = array<i64: 128, 128>}, {pipeline_mode = #tpu.pipeline_mode<synchronous>, transform_indices = @transform_5, window_bounds = array<i64: 1, 128>}, {pipeline_mode = #tpu.pipeline_mode<synchronous>, transform_indices = @transform_6, window_bounds = array<i64: 128, 128>}, {pipeline_mode = #tpu.pipeline_mode<synchronous>, transform_indices = @transform_7, window_bounds = array<i64: 1, 128>}, {transform_indices = @transform_8, window_bounds = array<i64: 8, 128>}]} {
    %c0 = arith.constant 0 : index
    %c0_0 = arith.constant 0 : index
    %0 = vector.load %arg1[%c0, %c0_0] : memref<8x128xf32, #tpu.memory_space<vmem>>, vector<8x128xf32>
    %c0_1 = arith.constant 0 : index
    %c0_2 = arith.constant 0 : index
    %1 = vector.load %arg2[%c0_1, %c0_2] : memref<8x128xf32, #tpu.memory_space<vmem>>, vector<8x128xf32>
    %2 = arith.mulf %0, %1 : vector<8x128xf32>
    %3 = arith.subf %0, %1 : vector<8x128xf32>
    %4 = tpu.concatenate %0, %1, %2, %3 in 1 : vector<8x128xf32>, vector<8x128xf32>, vector<8x128xf32>, vector<8x128xf32> -> vector<8x512xf32>
    %c0_3 = arith.constant 0 : index
    %c0_4 = arith.constant 0 : index
    %5 = vector.load %arg3[%c0_3, %c0_4] : memref<512x128xf32, #tpu.memory_space<vmem>>, vector<512x128xf32>
    %cst = arith.constant dense<0.000000e+00> : vector<8x128xf32>
    %6 = tpu.matmul %4, %5, %cst {dimension_numbers = #tpu.dot_dimension_numbers<[1], [0], [0], [1], [0, 0, 1, 1], [], []>} : vector<8x512xf32>, vector<512x128xf32>, vector<8x128xf32> -> vector<8x128xf32>
    %c0_5 = arith.constant 0 : index
    %c0_6 = arith.constant 0 : index
    %7 = vector.load %arg4[%c0_5, %c0_6] : memref<1x128xf32, #tpu.memory_space<vmem>>, vector<1x128xf32>
    %8 = vector.broadcast %7 : vector<1x128xf32> to vector<8x128xf32>
    %9 = arith.addf %6, %8 : vector<8x128xf32>
    %cst_7 = arith.constant 0.000000e+00 : f32
    %10 = vector.broadcast %cst_7 : f32 to vector<8x128xf32>
    %11 = arith.maximumf %9, %10 : vector<8x128xf32>
    %c0_8 = arith.constant 0 : index
    %c0_9 = arith.constant 0 : index
    %12 = vector.load %arg5[%c0_8, %c0_9] : memref<128x128xf32, #tpu.memory_space<vmem>>, vector<128x128xf32>
    %cst_10 = arith.constant dense<0.000000e+00> : vector<8x128xf32>
    %13 = tpu.matmul %11, %12, %cst_10 {dimension_numbers = #tpu.dot_dimension_numbers<[1], [0], [0], [1], [0, 0, 1, 1], [], []>} : vector<8x128xf32>, vector<128x128xf32>, vector<8x128xf32> -> vector<8x128xf32>
    %c0_11 = arith.constant 0 : index
    %c0_12 = arith.constant 0 : index
    %14 = vector.load %arg6[%c0_11, %c0_12] : memref<1x128xf32, #tpu.memory_space<vmem>>, vector<1x128xf32>
    %15 = vector.broadcast %14 : vector<1x128xf32> to vector<8x128xf32>
    %16 = arith.addf %13, %15 : vector<8x128xf32>
    %cst_13 = arith.constant 0.000000e+00 : f32
    %17 = vector.broadcast %cst_13 : f32 to vector<8x128xf32>
    %18 = arith.maximumf %16, %17 : vector<8x128xf32>
    %c0_14 = arith.constant 0 : index
    %c0_15 = arith.constant 0 : index
    %19 = vector.load %arg7[%c0_14, %c0_15] : memref<128x128xf32, #tpu.memory_space<vmem>>, vector<128x128xf32>
    %cst_16 = arith.constant dense<0.000000e+00> : vector<8x128xf32>
    %20 = tpu.matmul %18, %19, %cst_16 {dimension_numbers = #tpu.dot_dimension_numbers<[1], [0], [0], [1], [0, 0, 1, 1], [], []>} : vector<8x128xf32>, vector<128x128xf32>, vector<8x128xf32> -> vector<8x128xf32>
    %c0_17 = arith.constant 0 : index
    %c0_18 = arith.constant 0 : index
    %21 = vector.load %arg8[%c0_17, %c0_18] : memref<1x128xf32, #tpu.memory_space<vmem>>, vector<1x128xf32>
    %22 = vector.broadcast %21 : vector<1x128xf32> to vector<8x128xf32>
    %23 = arith.addf %20, %22 : vector<8x128xf32>
    %c0_19 = arith.constant 0 : index
    %c0_20 = arith.constant 0 : index
    %24 = vector.load %arg9[%c0_19, %c0_20] : memref<8x128xf32, #tpu.memory_space<vmem>>, vector<8x128xf32>
    tpu.vector_store %arg9[%c0_19, %c0_20], %23 {strides = array<i32>} : memref<8x128xf32, #tpu.memory_space<vmem>>, vector<8x128xf32>,
    return
  }
  func.func @transform_0(%arg0: i32) -> (i32, i32) {
    %c0_i32 = arith.constant 0 : i32
    %c0_i32_0 = arith.constant 0 : i32
    return %arg0, %c0_i32 : i32, i32
  }
  func.func @transform_1(%arg0: i32) -> (i32, i32) {
    %c0_i32 = arith.constant 0 : i32
    %c0_i32_0 = arith.constant 0 : i32
    return %arg0, %c0_i32 : i32, i32
  }
  func.func @transform_2(%arg0: i32) -> (i32, i32) {
    %c0_i32 = arith.constant 0 : i32
    %c0_i32_0 = arith.constant 0 : i32
    %c0_i32_1 = arith.constant 0 : i32
    return %c0_i32, %c0_i32_0 : i32, i32
  }
  func.func @transform_3(%arg0: i32) -> (i32, i32) {
    %c0_i32 = arith.constant 0 : i32
    %c0_i32_0 = arith.constant 0 : i32
    %c0_i32_1 = arith.constant 0 : i32
    return %c0_i32, %c0_i32_0 : i32, i32
  }
  func.func @transform_4(%arg0: i32) -> (i32, i32) {
    %c0_i32 = arith.constant 0 : i32
    %c0_i32_0 = arith.constant 0 : i32
    %c0_i32_1 = arith.constant 0 : i32
    return %c0_i32, %c0_i32_0 : i32, i32
  }
  func.func @transform_5(%arg0: i32) -> (i32, i32) {
    %c0_i32 = arith.constant 0 : i32
    %c0_i32_0 = arith.constant 0 : i32
    %c0_i32_1 = arith.constant 0 : i32
    return %c0_i32, %c0_i32_0 : i32, i32
  }
  func.func @transform_6(%arg0: i32) -> (i32, i32) {
    %c0_i32 = arith.constant 0 : i32
    %c0_i32_0 = arith.constant 0 : i32
    %c0_i32_1 = arith.constant 0 : i32
    return %c0_i32, %c0_i32_0 : i32, i32
  }
  func.func @transform_7(%arg0: i32) -> (i32, i32) {
    %c0_i32 = arith.constant 0 : i32
    %c0_i32_0 = arith.constant 0 : i32
    %c0_i32_1 = arith.constant 0 : i32
    return %c0_i32, %c0_i32_0 : i32, i32
  }
  func.func @transform_8(%arg0: i32) -> (i32, i32) {
    %c0_i32 = arith.constant 0 : i32
    %c0_i32_0 = arith.constant 0 : i32
    return %arg0, %c0_i32 : i32, i32
  }
}

</mosaic_0001>

<llo_original>
// kernel: tpu_custom_call.1
$region0: #{tpu_custom_call.1}
  #allocation0 [shape = 'u32[]', space=smem, size = 0x4, offset = 0x4, fixed_abs, tag = 'smem constant byte address 0x4 - core index']
  #allocation1 [shape = 'u32[144,128]{1,0:T(1,128)}', space=vmem, size = 0x12000, scoped, tag = 'internal scratch']
  %s0 = inlined_call_operand.hbm [shape: f32[8,128], index: 0, kind: input, shape index: {}]
  %s1 = inlined_call_operand.hbm [shape: f32[8,128], index: 1, kind: input, shape index: {}]
  %s2 = inlined_call_operand.hbm [shape: f32[512,128], index: 2, kind: input, shape index: {}]
  %s3 = inlined_call_operand.vmem [shape: f32[1,128], index: 3, kind: input, shape index: {}]
  %s4 = inlined_call_operand.hbm [shape: f32[128,128], index: 4, kind: input, shape index: {}]
  %s5 = inlined_call_operand.vmem [shape: f32[1,128], index: 5, kind: input, shape index: {}]
  %s6 = inlined_call_operand.hbm [shape: f32[128,128], index: 6, kind: input, shape index: {}]
  %s7 = inlined_call_operand.vmem [shape: f32[1,128], index: 7, kind: input, shape index: {}]
  %s8 = inlined_call_operand.hbm [shape: f32[8,128], index: 8, kind: output, shape index: {}]
  %s9 = sld [smem:[#allocation0]]
  $region62: #{tpu_custom_call.1} parent=0
    _
  %s11 = ssub.s32 1, %s9
  %s12 = scalar_select 0, %s11, %s9
  $region1: #{tpu_custom_call.1} parent=0
    #allocation2 [shape = 'u8[4096]{0}', space=vmem, size = 0x1000, scoped, tag = 'input window, operand 0, single buffered']
    #allocation3 [shape = 's32[1]{0}', space=sflag, size = 0x4, scoped, tag = 'scoped memory for tpu_custom_call.1']
    #allocation4 [shape = 's32[1]{0}', space=sflag, size = 0x4, scoped, tag = 'scoped memory for tpu_custom_call.1']
    #allocation5 [shape = 'u8[4096]{0}', space=vmem, size = 0x1000, scoped, tag = 'input window, operand 1, single buffered']
    #allocation6 [shape = 's32[1]{0}', space=sflag, size = 0x4, scoped, tag = 'scoped memory for tpu_custom_call.1']
    #allocation7 [shape = 'u8[262144]{0}', space=vmem, size = 0x40000, scoped, tag = 'input window, operand 2, single buffered']
    #allocation8 [shape = 'u8[65536]{0}', space=vmem, size = 0x10000, scoped, tag = 'input window, operand 4, single buffered']
    #allocation9 [shape = 's32[1]{0}', space=sflag, size = 0x4, scoped, tag = 'scoped memory for tpu_custom_call.1']
    #allocation10 [shape = 'u8[65536]{0}', space=vmem, size = 0x10000, scoped, tag = 'input window, operand 6, single buffered']
    #allocation11 [shape = 'u8[4096]{0}', space=vmem, size = 0x1000, scoped, tag = 'output window, operand 0, single buffered']
    %13 = vsyncpa [#allocation3], 0
    %14 = vsyncpa [#allocation6], 0
    %15 = vsyncpa [#allocation9], 0
    %16 = vsyncpa [#allocation4], 0
    // Predicated region
    $region2: #{tpu_custom_call.1} parent=1 // pred_check
      _
    $region3: #{tpu_custom_call.1} parent=1 // pred_check_branch
      %18 = sbr.rel (0) target = $region5
    $region4: #{tpu_custom_call.1} parent=1 // pred_region
      %s20 = ssub.s32 128, 128
      %21 = vsyncadd [#allocation3], %s20
      %s23 = sshll.u32 [#allocation2], 4
      %s24 = int_to_ptr.vmem [resolvable:$true] %s23
      %26 = dma.hbm_to_vmem [thread:$0]  %s0, 128, %s24, [#allocation3]
    $region5: #{tpu_custom_call.1} parent=1 // pred_fallthru
      _
    // Predicated region
    $region6: #{tpu_custom_call.1} parent=1 // pred_check
      _
    $region7: #{tpu_custom_call.1} parent=1 // pred_check_branch
      %28 = sbr.rel (0) target = $region9
    $region8: #{tpu_custom_call.1} parent=1 // pred_region
      %s30 = ssub.s32 128, 128
      %31 = vsyncadd [#allocation6], %s30
      %s33 = sshll.u32 [#allocation5], 4
      %s34 = int_to_ptr.vmem [resolvable:$true] %s33
      %36 = dma.hbm_to_vmem [thread:$0]  %s1, 128, %s34, [#allocation6]
    $region9: #{tpu_custom_call.1} parent=1 // pred_fallthru
      _
    // Predicated region
    $region10: #{tpu_custom_call.1} parent=1 // pred_check
      _
    $region11: #{tpu_custom_call.1} parent=1 // pred_check_branch
      %38 = sbr.rel (0) target = $region13
    $region12: #{tpu_custom_call.1} parent=1 // pred_region
      %s40 = ssub.s32 8192, 8192
      %41 = vsyncadd [#allocation6], %s40
      %s42 = sshll.u32 [#allocation7], 4
      %s43 = int_to_ptr.vmem [resolvable:$true] %s42
      %48 = dma.hbm_to_vmem [thread:$0]  %s2, 8192, %s43, [#allocation6], 128, 128, 8
    $region13: #{tpu_custom_call.1} parent=1 // pred_fallthru
      _
    // Predicated region
    $region14: #{tpu_custom_call.1} parent=1 // pred_check
      _
    $region15: #{tpu_custom_call.1} parent=1 // pred_check_branch
      %50 = sbr.rel (0) target = $region17
    $region16: #{tpu_custom_call.1} parent=1 // pred_region
      _
    $region17: #{tpu_custom_call.1} parent=1 // pred_fallthru
      _
    // Predicated region
    $region18: #{tpu_custom_call.1} parent=1 // pred_check
      _
    $region19: #{tpu_custom_call.1} parent=1 // pred_check_branch
      %52 = sbr.rel (0) target = $region21
    $region20: #{tpu_custom_call.1} parent=1 // pred_region
      %s54 = ssub.s32 2048, 2048
      %55 = vsyncadd [#allocation9], %s54
      %s56 = sshll.u32 [#allocation8], 4
      %s57 = int_to_ptr.vmem [resolvable:$true] %s56
      %62 = dma.hbm_to_vmem [thread:$0]  %s4, 2048, %s57, [#allocation9], 128, 128, 8
    $region21: #{tpu_custom_call.1} parent=1 // pred_fallthru
      _
    // Predicated region
    $region22: #{tpu_custom_call.1} parent=1 // pred_check
      _
    $region23: #{tpu_custom_call.1} parent=1 // pred_check_branch
      %64 = sbr.rel (0) target = $region25
    $region24: #{tpu_custom_call.1} parent=1 // pred_region
      _
    $region25: #{tpu_custom_call.1} parent=1 // pred_fallthru
      _
    // Predicated region
    $region26: #{tpu_custom_call.1} parent=1 // pred_check
      _
    $region27: #{tpu_custom_call.1} parent=1 // pred_check_branch
      %66 = sbr.rel (0) target = $region29
    $region28: #{tpu_custom_call.1} parent=1 // pred_region
      %s68 = ssub.s32 2048, 2048
      %69 = vsyncadd [#allocation9], %s68
      %s70 = sshll.u32 [#allocation10], 4
      %s71 = int_to_ptr.vmem [resolvable:$true] %s70
      %76 = dma.hbm_to_vmem [thread:$0]  %s6, 2048, %s71, [#allocation9], 128, 128, 8
    $region29: #{tpu_custom_call.1} parent=1 // pred_fallthru
      _
    // Predicated region
    $region30: #{tpu_custom_call.1} parent=1 // pred_check
      _
    $region31: #{tpu_custom_call.1} parent=1 // pred_check_branch
      %78 = sbr.rel (0) target = $region33
    $region32: #{tpu_custom_call.1} parent=1 // pred_region
      _
    $region33: #{tpu_custom_call.1} parent=1 // pred_fallthru
      _
    // Predicated region
    $region34: #{tpu_custom_call.1} parent=1 // pred_check
      _
    $region35: #{tpu_custom_call.1} parent=1 // pred_check_branch
      %80 = sbr.rel (0) target = $region37
    $region36: #{tpu_custom_call.1} parent=1 // pred_region
      %81 = dma.done [#allocation3], 128
    $region37: #{tpu_custom_call.1} parent=1 // pred_fallthru
      _
    // Predicated region
    $region38: #{tpu_custom_call.1} parent=1 // pred_check
      _
    $region39: #{tpu_custom_call.1} parent=1 // pred_check_branch
      %83 = sbr.rel (0) target = $region41
    $region40: #{tpu_custom_call.1} parent=1 // pred_region
      %84 = dma.done [#allocation6], 128
    $region41: #{tpu_custom_call.1} parent=1 // pred_fallthru
      _
    // Predicated region
    $region42: #{tpu_custom_call.1} parent=1 // pred_check
      _
    $region43: #{tpu_custom_call.1} parent=1 // pred_check_branch
      %86 = sbr.rel (0) target = $region45
    $region44: #{tpu_custom_call.1} parent=1 // pred_region
      %87 = dma.done [#allocation6], 8192
    $region45: #{tpu_custom_call.1} parent=1 // pred_fallthru
      _
    // Predicated region
    $region46: #{tpu_custom_call.1} parent=1 // pred_check
      _
    $region47: #{tpu_custom_call.1} parent=1 // pred_check_branch
      %89 = sbr.rel (0) target = $region49
    $region48: #{tpu_custom_call.1} parent=1 // pred_region
      %90 = dma.done [#allocation9], 2048
    $region49: #{tpu_custom_call.1} parent=1 // pred_fallthru
      _
    // Predicated region
    $region50: #{tpu_custom_call.1} parent=1 // pred_check
      _
    $region51: #{tpu_custom_call.1} parent=1 // pred_check_branch
      %92 = sbr.rel (0) target = $region53
    $region52: #{tpu_custom_call.1} parent=1 // pred_region
      %93 = dma.done [#allocation9], 2048
    $region53: #{tpu_custom_call.1} parent=1 // pred_fallthru
      _
    %v94 = vld [vmem:[#allocation2] sm:$0xff]
    %v95 = vld [vmem:[#allocation5] sm:$0xff]
    %v96 = vmul.f32 %v94, %v95
    %v97 = vsub.f32 %v94, %v95
    %v98 = vld [vmem:[#allocation7] sm:$0xff]
    %v99 = vld [vmem:[#allocation7 + $0x8] sm:$0xff]
    %v100 = vld [vmem:[#allocation7 + $0x10] sm:$0xff]
    %v101 = vld [vmem:[#allocation7 + $0x18] sm:$0xff]
    %v102 = vld [vmem:[#allocation7 + $0x20] sm:$0xff]
    %v103 = vld [vmem:[#allocation7 + $0x28] sm:$0xff]
    %v104 = vld [vmem:[#allocation7 + $0x30] sm:$0xff]
    %v105 = vld [vmem:[#allocation7 + $0x38] sm:$0xff]
    %v106 = vld [vmem:[#allocation7 + $0x40] sm:$0xff]
    %v107 = vld [vmem:[#allocation7 + $0x48] sm:$0xff]
    %v108 = vld [vmem:[#allocation7 + $0x50] sm:$0xff]
    %v109 = vld [vmem:[#allocation7 + $0x58] sm:$0xff]
    %v110 = vld [vmem:[#allocation7 + $0x60] sm:$0xff]
    %v111 = vld [vmem:[#allocation7 + $0x68] sm:$0xff]
    %v112 = vld [vmem:[#allocation7 + $0x70] sm:$0xff]
    %v113 = vld [vmem:[#allocation7 + $0x78] sm:$0xff]
    %v114 = vld [vmem:[#allocation7 + $0x80] sm:$0xff]
    %v115 = vld [vmem:[#allocation7 + $0x88] sm:$0xff]
    %v116 = vld [vmem:[#allocation7 + $0x90] sm:$0xff]
    %v117 = vld [vmem:[#allocation7 + $0x98] sm:$0xff]
    %v118 = vld [vmem:[#allocation7 + $0xa0] sm:$0xff]
    %v119 = vld [vmem:[#allocation7 + $0xa8] sm:$0xff]
    %v120 = vld [vmem:[#allocation7 + $0xb0] sm:$0xff]
    %v121 = vld [vmem:[#allocation7 + $0xb8] sm:$0xff]
    %v122 = vld [vmem:[#allocation7 + $0xc0] sm:$0xff]
    %v123 = vld [vmem:[#allocation7 + $0xc8] sm:$0xff]
    %v124 = vld [vmem:[#allocation7 + $0xd0] sm:$0xff]
    %v125 = vld [vmem:[#allocation7 + $0xd8] sm:$0xff]
    %v126 = vld [vmem:[#allocation7 + $0xe0] sm:$0xff]
    %v127 = vld [vmem:[#allocation7 + $0xe8] sm:$0xff]
    %v128 = vld [vmem:[#allocation7 + $0xf0] sm:$0xff]
    %v129 = vld [vmem:[#allocation7 + $0xf8] sm:$0xff]
    %v130 = vld [vmem:[#allocation7 + $0x100] sm:$0xff]
    %v131 = vld [vmem:[#allocation7 + $0x108] sm:$0xff]
    %v132 = vld [vmem:[#allocation7 + $0x110] sm:$0xff]
    %v133 = vld [vmem:[#allocation7 + $0x118] sm:$0xff]
    %v134 = vld [vmem:[#allocation7 + $0x120] sm:$0xff]
    %v135 = vld [vmem:[#allocation7 + $0x128] sm:$0xff]
    %v136 = vld [vmem:[#allocation7 + $0x130] sm:$0xff]
    %v137 = vld [vmem:[#allocation7 + $0x138] sm:$0xff]
    %v138 = vld [vmem:[#allocation7 + $0x140] sm:$0xff]
    %v139 = vld [vmem:[#allocation7 + $0x148] sm:$0xff]
    %v140 = vld [vmem:[#allocation7 + $0x150] sm:$0xff]
    %v141 = vld [vmem:[#allocation7 + $0x158] sm:$0xff]
    %v142 = vld [vmem:[#allocation7 + $0x160] sm:$0xff]
    %v143 = vld [vmem:[#allocation7 + $0x168] sm:$0xff]
    %v144 = vld [vmem:[#allocation7 + $0x170] sm:$0xff]
    %v145 = vld [vmem:[#allocation7 + $0x178] sm:$0xff]
    %v146 = vld [vmem:[#allocation7 + $0x180] sm:$0xff]
    %v147 = vld [vmem:[#allocation7 + $0x188] sm:$0xff]
    %v148 = vld [vmem:[#allocation7 + $0x190] sm:$0xff]
    %v149 = vld [vmem:[#allocation7 + $0x198] sm:$0xff]
    %v150 = vld [vmem:[#allocation7 + $0x1a0] sm:$0xff]
    %v151 = vld [vmem:[#allocation7 + $0x1a8] sm:$0xff]
    %v152 = vld [vmem:[#allocation7 + $0x1b0] sm:$0xff]
    %v153 = vld [vmem:[#allocation7 + $0x1b8] sm:$0xff]
    %v154 = vld [vmem:[#allocation7 + $0x1c0] sm:$0xff]
    %v155 = vld [vmem:[#allocation7 + $0x1c8] sm:$0xff]
    %v156 = vld [vmem:[#allocation7 + $0x1d0] sm:$0xff]
    %v157 = vld [vmem:[#allocation7 + $0x1d8] sm:$0xff]
    %v158 = vld [vmem:[#allocation7 + $0x1e0] sm:$0xff]
    %v159 = vld [vmem:[#allocation7 + $0x1e8] sm:$0xff]
    %v160 = vld [vmem:[#allocation7 + $0x1f0] sm:$0xff]
    %v161 = vld [vmem:[#allocation7 + $0x1f8] sm:$0xff]
    %v162 = vld [vmem:[%s3] sm:$0x1]
    %v164 = vlaneseq
    %v165 = vshrl.u32 %v164, 7
    %v166 = vsub.s32 0, %v165
    %v167 = vrot.slane %v162, %v166
    %169 = vmatprep.subr.mxu0 0.0
    %170 = vmatpush1.msra.mxu0 %v113
    %171 = vmatprep.subr.mxu0 0.0
    %172 = vmatpush1.msra.mxu0 %v112
    %173 = vmatprep.subr.mxu0 0.0
    %174 = vmatpush1.msra.mxu0 %v111
    %175 = vmatprep.subr.mxu0 0.0
    %176 = vmatpush1.msra.mxu0 %v110
    %177 = vmatprep.subr.mxu0 0.0
    %178 = vmatpush1.msra.mxu0 %v109
    %179 = vmatprep.subr.mxu0 0.0
    %180 = vmatpush1.msra.mxu0 %v108
    %181 = vmatprep.subr.mxu0 0.0
    %182 = vmatpush1.msra.mxu0 %v107
    %183 = vmatprep.subr.mxu0 0.0
    %184 = vmatpush1.msra.mxu0 %v106
    %185 = vmatprep.subr.mxu0 0.0
    %186 = vmatpush1.msra.mxu0 %v105
    %187 = vmatprep.subr.mxu0 0.0
    %188 = vmatpush1.msra.mxu0 %v104
    %189 = vmatprep.subr.mxu0 0.0
    %190 = vmatpush1.msra.mxu0 %v103
    %191 = vmatprep.subr.mxu0 0.0
    %192 = vmatpush1.msra.mxu0 %v102
    %193 = vmatprep.subr.mxu0 0.0
    %194 = vmatpush1.msra.mxu0 %v101
    %195 = vmatprep.subr.mxu0 0.0
    %196 = vmatpush1.msra.mxu0 %v100
    %197 = vmatprep.subr.mxu0 0.0
    %198 = vmatpush1.msra.mxu0 %v99
    %199 = vmatprep.subr.mxu0 0.0
    %200 = vmatpush1.msra.mxu0 %v98
    %201 = vmatprep.subr.mxu0 0.0
    %202 = vmatpush2.msra.mxu0 %v129
    %203 = vmatprep.subr.mxu0 0.0
    %204 = vmatpush2.msra.mxu0 %v128
    %205 = vmatprep.subr.mxu0 0.0
    %206 = vmatpush2.msra.mxu0 %v127
    %207 = vmatprep.subr.mxu0 0.0
    %208 = vmatpush2.msra.mxu0 %v126
    %209 = vmatprep.subr.mxu0 0.0
    %210 = vmatpush2.msra.mxu0 %v125
    %211 = vmatprep.subr.mxu0 0.0
    %212 = vmatpush2.msra.mxu0 %v124
    %213 = vmatprep.subr.mxu0 0.0
    %214 = vmatpush2.msra.mxu0 %v123
    %215 = vmatprep.subr.mxu0 0.0
    %216 = vmatpush2.msra.mxu0 %v122
    %217 = vmatprep.subr.mxu0 0.0
    %218 = vmatpush2.msra.mxu0 %v121
    %219 = vmatprep.subr.mxu0 0.0
    %220 = vmatpush2.msra.mxu0 %v120
    %221 = vmatprep.subr.mxu0 0.0
    %222 = vmatpush2.msra.mxu0 %v119
    %223 = vmatprep.subr.mxu0 0.0
    %224 = vmatpush2.msra.mxu0 %v118
    %225 = vmatprep.subr.mxu0 0.0
    %226 = vmatpush2.msra.mxu0 %v117
    %227 = vmatprep.subr.mxu0 0.0
    %228 = vmatpush2.msra.mxu0 %v116
    %229 = vmatprep.subr.mxu0 0.0
    %230 = vmatpush2.msra.mxu0 %v115
    %231 = vmatprep.subr.mxu0 0.0
    %232 = vmatpush2.msra.mxu0 %v114
    %233 = vmatprep.mubr.f32.mxu0 %v95
    %234 = vmatmul.mubr.f32.gmra.mxu0 %v94
    %v235 = vpop.f32.mrf.mxu0
    %v236 = vadd.f32 %v167, %v235
    %v237 = vpop.f32.mrf.mxu0
    %238 = vdwg.mxu0
    %239 = vmatprep.subr.mxu0 0.0
    %240 = vmatpush1.msra.mxu0 %v145
    %241 = vmatprep.subr.mxu0 0.0
    %242 = vmatpush1.msra.mxu0 %v144
    %243 = vmatprep.subr.mxu0 0.0
    %244 = vmatpush1.msra.mxu0 %v143
    %245 = vmatprep.subr.mxu0 0.0
    %246 = vmatpush1.msra.mxu0 %v142
    %247 = vmatprep.subr.mxu0 0.0
    %248 = vmatpush1.msra.mxu0 %v141
    %249 = vmatprep.subr.mxu0 0.0
    %250 = vmatpush1.msra.mxu0 %v140
    %251 = vmatprep.subr.mxu0 0.0
    %252 = vmatpush1.msra.mxu0 %v139
    %253 = vmatprep.subr.mxu0 0.0
    %254 = vmatpush1.msra.mxu0 %v138
    %255 = vmatprep.subr.mxu0 0.0
    %256 = vmatpush1.msra.mxu0 %v137
    %257 = vmatprep.subr.mxu0 0.0
    %258 = vmatpush1.msra.mxu0 %v136
    %259 = vmatprep.subr.mxu0 0.0
    %260 = vmatpush1.msra.mxu0 %v135
    %261 = vmatprep.subr.mxu0 0.0
    %262 = vmatpush1.msra.mxu0 %v134
    %263 = vmatprep.subr.mxu0 0.0
    %264 = vmatpush1.msra.mxu0 %v133
    %265 = vmatprep.subr.mxu0 0.0
    %266 = vmatpush1.msra.mxu0 %v132
    %267 = vmatprep.subr.mxu0 0.0
    %268 = vmatpush1.msra.mxu0 %v131
    %269 = vmatprep.subr.mxu0 0.0
    %270 = vmatpush1.msra.mxu0 %v130
    %271 = vmatprep.subr.mxu0 0.0
    %272 = vmatpush2.msra.mxu0 %v161
    %273 = vmatprep.subr.mxu0 0.0
    %274 = vmatpush2.msra.mxu0 %v160
    %275 = vmatprep.subr.mxu0 0.0
    %276 = vmatpush2.msra.mxu0 %v159
    %277 = vmatprep.subr.mxu0 0.0
    %278 = vmatpush2.msra.mxu0 %v158
    %279 = vmatprep.subr.mxu0 0.0
    %280 = vmatpush2.msra.mxu0 %v157
    %281 = vmatprep.subr.mxu0 0.0
    %282 = vmatpush2.msra.mxu0 %v156
    %283 = vmatprep.subr.mxu0 0.0
    %284 = vmatpush2.msra.mxu0 %v155
    %285 = vmatprep.subr.mxu0 0.0
    %286 = vmatpush2.msra.mxu0 %v154
    %287 = vmatprep.subr.mxu0 0.0
    %288 = vmatpush2.msra.mxu0 %v153
    %289 = vmatprep.subr.mxu0 0.0
    %290 = vmatpush2.msra.mxu0 %v152
    %291 = vmatprep.subr.mxu0 0.0
    %292 = vmatpush2.msra.mxu0 %v151
    %293 = vmatprep.subr.mxu0 0.0
    %294 = vmatpush2.msra.mxu0 %v150
    %295 = vmatprep.subr.mxu0 0.0
    %296 = vmatpush2.msra.mxu0 %v149
    %297 = vmatprep.subr.mxu0 0.0
    %298 = vmatpush2.msra.mxu0 %v148
    %299 = vmatprep.subr.mxu0 0.0
    %300 = vmatpush2.msra.mxu0 %v147
    %301 = vmatprep.subr.mxu0 0.0
    %302 = vmatpush2.msra.mxu0 %v146
    %303 = vmatprep.mubr.f32.mxu0 %v97
    %304 = vmatmul.mubr.f32.gmra.mxu0 %v96
    %v305 = vpop.f32.mrf.mxu0
    %v306 = vadd.f32 %v236, %v305
    %v307 = vpop.f32.mrf.mxu0
    %308 = vdwg.mxu0
    %v309 = vmax.f32 %v306, 0.0
    %v310 = vld [vmem:[#allocation8] sm:$0xff]
    %v311 = vld [vmem:[#allocation8 + $0x8] sm:$0xff]
    %v312 = vld [vmem:[#allocation8 + $0x10] sm:$0xff]
    %v313 = vld [vmem:[#allocation8 + $0x18] sm:$0xff]
    %v314 = vld [vmem:[#allocation8 + $0x20] sm:$0xff]
    %v315 = vld [vmem:[#allocation8 + $0x28] sm:$0xff]
    %v316 = vld [vmem:[#allocation8 + $0x30] sm:$0xff]
    %v317 = vld [vmem:[#allocation8 + $0x38] sm:$0xff]
    %v318 = vld [vmem:[#allocation8 + $0x40] sm:$0xff]
    %v319 = vld [vmem:[#allocation8 + $0x48] sm:$0xff]
    %v320 = vld [vmem:[#allocation8 + $0x50] sm:$0xff]
    %v321 = vld [vmem:[#allocation8 + $0x58] sm:$0xff]
    %v322 = vld [vmem:[#allocation8 + $0x60] sm:$0xff]
    %v323 = vld [vmem:[#allocation8 + $0x68] sm:$0xff]
    %v324 = vld [vmem:[#allocation8 + $0x70] sm:$0xff]
    %v325 = vld [vmem:[#allocation8 + $0x78] sm:$0xff]
    %v326 = vld [vmem:[%s5] sm:$0x1]
    %v328 = vlaneseq
    %v329 = vshrl.u32 %v328, 7
    %v330 = vsub.s32 0, %v329
    %v331 = vrot.slane %v326, %v330
    %333 = vmatprep.subr.mxu0 0.0
    %334 = vmatpush1.msra.mxu0 %v325
    %335 = vmatprep.subr.mxu0 0.0
    %336 = vmatpush1.msra.mxu0 %v324
    %337 = vmatprep.subr.mxu0 0.0
    %338 = vmatpush1.msra.mxu0 %v323
    %339 = vmatprep.subr.mxu0 0.0
    %340 = vmatpush1.msra.mxu0 %v322
    %341 = vmatprep.subr.mxu0 0.0
    %342 = vmatpush1.msra.mxu0 %v321
    %343 = vmatprep.subr.mxu0 0.0
    %344 = vmatpush1.msra.mxu0 %v320
    %345 = vmatprep.subr.mxu0 0.0
    %346 = vmatpush1.msra.mxu0 %v319
    %347 = vmatprep.subr.mxu0 0.0
    %348 = vmatpush1.msra.mxu0 %v318
    %349 = vmatprep.subr.mxu0 0.0
    %350 = vmatpush1.msra.mxu0 %v317
    %351 = vmatprep.subr.mxu0 0.0
    %352 = vmatpush1.msra.mxu0 %v316
    %353 = vmatprep.subr.mxu0 0.0
    %354 = vmatpush1.msra.mxu0 %v315
    %355 = vmatprep.subr.mxu0 0.0
    %356 = vmatpush1.msra.mxu0 %v314
    %357 = vmatprep.subr.mxu0 0.0
    %358 = vmatpush1.msra.mxu0 %v313
    %359 = vmatprep.subr.mxu0 0.0
    %360 = vmatpush1.msra.mxu0 %v312
    %361 = vmatprep.subr.mxu0 0.0
    %362 = vmatpush1.msra.mxu0 %v311
    %363 = vmatprep.subr.mxu0 0.0
    %364 = vmatpush1.msra.mxu0 %v310
    %365 = vmatprep.subr.mxu0 0.0
    %366 = vmatpush2.msra.mxu0 0.0
    %367 = vmatprep.subr.mxu0 0.0
    %368 = vmatpush2.msra.mxu0 0.0
    %369 = vmatprep.subr.mxu0 0.0
    %370 = vmatpush2.msra.mxu0 0.0
    %371 = vmatprep.subr.mxu0 0.0
    %372 = vmatpush2.msra.mxu0 0.0
    %373 = vmatprep.subr.mxu0 0.0
    %374 = vmatpush2.msra.mxu0 0.0
    %375 = vmatprep.subr.mxu0 0.0
    %376 = vmatpush2.msra.mxu0 0.0
    %377 = vmatprep.subr.mxu0 0.0
    %378 = vmatpush2.msra.mxu0 0.0
    %379 = vmatprep.subr.mxu0 0.0
    %380 = vmatpush2.msra.mxu0 0.0
    %381 = vmatprep.subr.mxu0 0.0
    %382 = vmatpush2.msra.mxu0 0.0
    %383 = vmatprep.subr.mxu0 0.0
    %384 = vmatpush2.msra.mxu0 0.0
    %385 = vmatprep.subr.mxu0 0.0
    %386 = vmatpush2.msra.mxu0 0.0
    %387 = vmatprep.subr.mxu0 0.0
    %388 = vmatpush2.msra.mxu0 0.0
    %389 = vmatprep.subr.mxu0 0.0
    %390 = vmatpush2.msra.mxu0 0.0
    %391 = vmatprep.subr.mxu0 0.0
    %392 = vmatpush2.msra.mxu0 0.0
    %393 = vmatprep.subr.mxu0 0.0
    %394 = vmatpush2.msra.mxu0 0.0
    %395 = vmatprep.subr.mxu0 0.0
    %396 = vmatpush2.msra.mxu0 0.0
    %397 = vmatprep.mubr.f32.mxu0 0.0
    %398 = vmatmul.mubr.f32.gmra.mxu0 %v309
    %v399 = vpop.f32.mrf.mxu0
    %v400 = vadd.f32 %v331, %v399
    %v401 = vpop.f32.mrf.mxu0
    %402 = vdwg.mxu0
    %v403 = vmax.f32 %v400, 0.0
    %v404 = vld [vmem:[#allocation10] sm:$0xff]
    %v405 = vld [vmem:[#allocation10 + $0x8] sm:$0xff]
    %v406 = vld [vmem:[#allocation10 + $0x10] sm:$0xff]
    %v407 = vld [vmem:[#allocation10 + $0x18] sm:$0xff]
    %v408 = vld [vmem:[#allocation10 + $0x20] sm:$0xff]
    %v409 = vld [vmem:[#allocation10 + $0x28] sm:$0xff]
    %v410 = vld [vmem:[#allocation10 + $0x30] sm:$0xff]
    %v411 = vld [vmem:[#allocation10 + $0x38] sm:$0xff]
    %v412 = vld [vmem:[#allocation10 + $0x40] sm:$0xff]
    %v413 = vld [vmem:[#allocation10 + $0x48] sm:$0xff]
    %v414 = vld [vmem:[#allocation10 + $0x50] sm:$0xff]
    %v415 = vld [vmem:[#allocation10 + $0x58] sm:$0xff]
    %v416 = vld [vmem:[#allocation10 + $0x60] sm:$0xff]
    %v417 = vld [vmem:[#allocation10 + $0x68] sm:$0xff]
    %v418 = vld [vmem:[#allocation10 + $0x70] sm:$0xff]
    %v419 = vld [vmem:[#allocation10 + $0x78] sm:$0xff]
    %v420 = vld [vmem:[%s7] sm:$0x1]
    %v422 = vlaneseq
    %v423 = vshrl.u32 %v422, 7
    %v424 = vsub.s32 0, %v423
    %v425 = vrot.slane %v420, %v424
    %427 = vmatprep.subr.mxu0 0.0
    %428 = vmatpush1.msra.mxu0 %v419
    %429 = vmatprep.subr.mxu0 0.0
    %430 = vmatpush1.msra.mxu0 %v418
    %431 = vmatprep.subr.mxu0 0.0
    %432 = vmatpush1.msra.mxu0 %v417
    %433 = vmatprep.subr.mxu0 0.0
    %434 = vmatpush1.msra.mxu0 %v416
    %435 = vmatprep.subr.mxu0 0.0
    %436 = vmatpush1.msra.mxu0 %v415
    %437 = vmatprep.subr.mxu0 0.0
    %438 = vmatpush1.msra.mxu0 %v414
    %439 = vmatprep.subr.mxu0 0.0
    %440 = vmatpush1.msra.mxu0 %v413
    %441 = vmatprep.subr.mxu0 0.0
    %442 = vmatpush1.msra.mxu0 %v412
    %443 = vmatprep.subr.mxu0 0.0
    %444 = vmatpush1.msra.mxu0 %v411
    %445 = vmatprep.subr.mxu0 0.0
    %446 = vmatpush1.msra.mxu0 %v410
    %447 = vmatprep.subr.mxu0 0.0
    %448 = vmatpush1.msra.mxu0 %v409
    %449 = vmatprep.subr.mxu0 0.0
    %450 = vmatpush1.msra.mxu0 %v408
    %451 = vmatprep.subr.mxu0 0.0
    %452 = vmatpush1.msra.mxu0 %v407
    %453 = vmatprep.subr.mxu0 0.0
    %454 = vmatpush1.msra.mxu0 %v406
    %455 = vmatprep.subr.mxu0 0.0
    %456 = vmatpush1.msra.mxu0 %v405
    %457 = vmatprep.subr.mxu0 0.0
    %458 = vmatpush1.msra.mxu0 %v404
    %459 = vmatprep.subr.mxu0 0.0
    %460 = vmatpush2.msra.mxu0 0.0
    %461 = vmatprep.subr.mxu0 0.0
    %462 = vmatpush2.msra.mxu0 0.0
    %463 = vmatprep.subr.mxu0 0.0
    %464 = vmatpush2.msra.mxu0 0.0
    %465 = vmatprep.subr.mxu0 0.0
    %466 = vmatpush2.msra.mxu0 0.0
    %467 = vmatprep.subr.mxu0 0.0
    %468 = vmatpush2.msra.mxu0 0.0
    %469 = vmatprep.subr.mxu0 0.0
    %470 = vmatpush2.msra.mxu0 0.0
    %471 = vmatprep.subr.mxu0 0.0
    %472 = vmatpush2.msra.mxu0 0.0
    %473 = vmatprep.subr.mxu0 0.0
    %474 = vmatpush2.msra.mxu0 0.0
    %475 = vmatprep.subr.mxu0 0.0
    %476 = vmatpush2.msra.mxu0 0.0
    %477 = vmatprep.subr.mxu0 0.0
    %478 = vmatpush2.msra.mxu0 0.0
    %479 = vmatprep.subr.mxu0 0.0
    %480 = vmatpush2.msra.mxu0 0.0
    %481 = vmatprep.subr.mxu0 0.0
    %482 = vmatpush2.msra.mxu0 0.0
    %483 = vmatprep.subr.mxu0 0.0
    %484 = vmatpush2.msra.mxu0 0.0
    %485 = vmatprep.subr.mxu0 0.0
    %486 = vmatpush2.msra.mxu0 0.0
    %487 = vmatprep.subr.mxu0 0.0
    %488 = vmatpush2.msra.mxu0 0.0
    %489 = vmatprep.subr.mxu0 0.0
    %490 = vmatpush2.msra.mxu0 0.0
    %491 = vmatprep.mubr.f32.mxu0 0.0
    %492 = vmatmul.mubr.f32.gmra.mxu0 %v403
    %v493 = vpop.f32.mrf.mxu0
    %v494 = vadd.f32 %v425, %v493
    %v495 = vpop.f32.mrf.mxu0
    %496 = vdwg.mxu0
    %497 = vst [vmem:[#allocation11] sm:$0xff] %v494
    // Predicated region
    $region54: #{tpu_custom_call.1} parent=1 // pred_check
      _
    $region55: #{tpu_custom_call.1} parent=1 // pred_check_branch
      %499 = sbr.rel (0) target = $region57
    $region56: #{tpu_custom_call.1} parent=1 // pred_region
      %s501 = ssub.s32 128, 128
      %502 = vsyncadd [#allocation4], %s501
      %s504 = sshll.u32 [#allocation11], 4
      %s505 = int_to_ptr.vmem [resolvable:$true] %s504
      %507 = dma.vmem_to_hbm [thread:$0]  %s505, 128, %s8, [#allocation4]
    $region57: #{tpu_custom_call.1} parent=1 // pred_fallthru
      _
    // Predicated region
    $region58: #{tpu_custom_call.1} parent=1 // pred_check
      _
    $region59: #{tpu_custom_call.1} parent=1 // pred_check_branch
      %509 = sbr.rel (0) target = $region61
    $region60: #{tpu_custom_call.1} parent=1 // pred_region
      %510 = dma.done [#allocation4], 128
    $region61: #{tpu_custom_call.1} parent=1 // pred_fallthru
      _
    %511 = vsyncpa [#allocation3], 1
    %512 = vsyncpa [#allocation6], 1
    %513 = vsyncpa [#allocation9], 1
    %514 = vsyncpa [#allocation4], 1

</llo_original>
